<compile_context>
chip_gen: v7x
topology: tpu7x:2x2x1
jax: 0.10.0
libtpu: 0.0.40
codegen_flags: <defaults>
</compile_context>

<pallas_src>
import functools

import jax
import jax.numpy as jnp
from jax.experimental import pallas as pl
from jax.experimental.pallas import tpu as pltpu


def _round_up(x, m):
    return ((x + m - 1) // m) * m


def _cdiv(a, b):
    return (a + b - 1) // b


# minimum rows per tile worth splitting across v7x's two TensorCores
_MIN_SPLIT_ROWS = 256


# ----------------------- packed-parameter slab layout ------------------------
def _slab_layout(in_dim, hidden_dim, num_experts, state_dim):
    """Row offsets of each weight/bias inside the single resident slab.

    Every block starts on an 8-row boundary and the slab is 128-lane wide, so
    all in-kernel static slices are (8,128)-tile friendly.
    """
    H, E, S = hidden_dim, num_experts, state_dim
    r_in = _round_up(in_dim, 8)
    r_h = _round_up(H, 8)
    n_out = E * S + E                       # [means | logits]
    n_pad = _round_up(n_out, 128)
    lane = max(_round_up(H, 128), n_pad)

    o_w1 = 0
    o_b1 = o_w1 + r_in
    o_w2 = o_b1 + 8
    o_b2 = o_w2 + r_h
    o_wo = o_b2 + 8
    o_bo = o_wo + r_h
    rows = o_bo + 8
    return dict(r_in=r_in, r_h=r_h, n_out=n_out, n_pad=n_pad, lane=lane,
                o_w1=o_w1, o_b1=o_b1, o_w2=o_w2, o_b2=o_b2,
                o_wo=o_wo, o_bo=o_bo, rows=rows)


# ----------------------------- Pallas kernel ---------------------------------
def _moe_kernel(x_ref, p_ref, out_ref, *,
                r_in, H, n_pad, o_b1, o_w2, o_b2, o_wo, o_bo):
    x = x_ref[...]                                          # (tb, r_in)

    # linear1 (single K=r_in dot; padded rows of w1 are zero) + SiLU
    w1 = p_ref[0:r_in, 0:H]
    b1 = p_ref[o_b1:o_b1 + 1, 0:H]
    h1 = jnp.dot(x, w1, preferred_element_type=jnp.float32) + b1
    h1 = h1 * jax.nn.sigmoid(h1)

    # linear2 + SiLU
    w2 = p_ref[o_w2:o_w2 + H, 0:H]
    b2 = p_ref[o_b2:o_b2 + 1, 0:H]
    h2 = jnp.dot(h1, w2, preferred_element_type=jnp.float32) + b2
    h2 = h2 * jax.nn.sigmoid(h2)

    # fused, lane-dense output head: columns = [expert means | logits | 0-pad]
    w_out = p_ref[o_wo:o_wo + H, 0:n_pad]
    b_out = p_ref[o_bo:o_bo + 1, 0:n_pad]
    out_ref[...] = (jnp.dot(h2, w_out, preferred_element_type=jnp.float32)
                    + b_out)


# ------------------------------ wrapper ---------------------------------------
@functools.partial(jax.jit,
                   static_argnames=("hidden_dim", "num_experts", "state_dim",
                                    "block_b"))
def moe_forward(state, skill, params_slab, *,
                hidden_dim, num_experts, state_dim, block_b=1024):
    """Returns (mixture_logits, expert_means).

    mixture_logits: (B, num_experts)            -- Categorical logits
    expert_means:   (B, num_experts, state_dim) -- component means (identity cov)
    """
    B = state.shape[0]
    in_dim = state.shape[1] + skill.shape[1]
    H, E, S = hidden_dim, num_experts, state_dim
    L = _slab_layout(in_dim, H, E, S)

    # ---- balanced batch tiling (feedback 1, 2, 8) ----------------------------
    n_tiles = _cdiv(B, block_b)
    if B >= 2 * _MIN_SPLIT_ROWS:
        # v7x: guarantee >= 2 (and even) grid steps so ("parallel",) shards
        # the batch across both TensorCores; no-op cost on v5e/v6e.
        n_tiles = max(n_tiles, 2)
        if n_tiles % 2:
            n_tiles += 1
    tb = _round_up(_cdiv(B, n_tiles), 8)
    b_pad = _round_up(B, tb)

    # single packed activation input (== concat([state, skill]) lane-padded)
    x = jnp.concatenate([state.astype(jnp.float32),
                         skill.astype(jnp.float32)], axis=1)
    x = jnp.pad(x, ((0, b_pad - B), (0, L["r_in"] - in_dim)))

    kernel = functools.partial(
        _moe_kernel,
        r_in=L["r_in"], H=H, n_pad=L["n_pad"],
        o_b1=L["o_b1"], o_w2=L["o_w2"], o_b2=L["o_b2"],
        o_wo=L["o_wo"], o_bo=L["o_bo"])

    out = pl.pallas_call(
        kernel,
        out_shape=jax.ShapeDtypeStruct((b_pad, L["n_pad"]), jnp.float32),
        grid=(b_pad // tb,),
        in_specs=[
            # batch-tiled activations (double-buffered across grid steps)
            pl.BlockSpec((tb, L["r_in"]), lambda i: (i, 0)),
            # single resident parameter slab (same block every step)
            pl.BlockSpec((L["rows"], L["lane"]), lambda i: (0, 0)),
        ],
        out_specs=pl.BlockSpec((tb, L["n_pad"]), lambda i: (i, 0)),
        compiler_params=pltpu.CompilerParams(
            dimension_semantics=("parallel",)),
    )(x, params_slab)

    # Slices of the padded slab fuse under jit; means block is column-0 so the
    # reshape is a free row-major reshape (feedback 3/4).
    means = out[:B, :E * S].reshape(B, E, S)
    logits = out[:B, E * S:E * S + E]
    return logits, means


# --------------------------- parameter init -----------------------------------
def init_raw_params(key, state_dim, skill_dim, hidden_dim, num_experts):
    """nn.Linear-style init (uniform +-1/sqrt(fan_in)); weights stored (in, out).

    Mirrors the torch module: linear1, linear2, expert_log_prob_contribution,
    and num_experts separate expert heads.
    """
    in_dim = state_dim + skill_dim
    H, E, S = hidden_dim, num_experts, state_dim
    ks = jax.random.split(key, 6 + 2 * E)

    def lin(kw, kb, fan_in, fan_out):
        bound = 1.0 / jnp.sqrt(fan_in)
        w = jax.random.uniform(kw, (fan_in, fan_out), jnp.float32, -bound, bound)
        b = jax.random.uniform(kb, (fan_out,), jnp.float32, -bound, bound)
        return w, b

    w1, b1 = lin(ks[0], ks[1], in_dim, H)
    w2, b2 = lin(ks[2], ks[3], H, H)
    wg, bg = lin(ks[4], ks[5], H, E)
    w_heads, b_heads = [], []
    for e in range(E):
        wh, bh = lin(ks[6 + 2 * e], ks[7 + 2 * e], H, S)
        w_heads.append(wh)
        b_heads.append(bh)
    return (w1, b1, w2, b2, wg, bg, tuple(w_heads), tuple(b_heads))


def pack_params(raw, state_dim, skill_dim, hidden_dim, num_experts):
    """Pack all weights/biases into one (rows, 128k) f32 slab.

    Output-head columns are packed [expert means (expert-major) | logits | pad]
    so the means block is the column-0 slice of the kernel output.
    """
    w1, b1, w2, b2, wg, bg, w_heads, b_heads = raw
    in_dim = state_dim + skill_dim
    H, E, S = hidden_dim, num_experts, state_dim
    L = _slab_layout(in_dim, H, E, S)

    w_out = jnp.zeros((H, L["n_pad"]), jnp.float32)
    b_out = jnp.zeros((L["n_pad"],), jnp.float32)
    for e in range(E):
        w_out = w_out.at[:, e * S:(e + 1) * S].set(w_heads[e])
        b_out = b_out.at[e * S:(e + 1) * S].set(b_heads[e])
    w_out = w_out.at[:, E * S:E * S + E].set(wg)
    b_out = b_out.at[E * S:E * S + E].set(bg)

    slab = jnp.zeros((L["rows"], L["lane"]), jnp.float32)
    slab = slab.at[L["o_w1"]:L["o_w1"] + in_dim, :H].set(w1)
    slab = slab.at[L["o_b1"], :H].set(b1)
    slab = slab.at[L["o_w2"]:L["o_w2"] + H, :H].set(w2)
    slab = slab.at[L["o_b2"], :H].set(b2)
    slab = slab.at[L["o_wo"]:L["o_wo"] + H, :L["n_pad"]].set(w_out)
    slab = slab.at[L["o_bo"], :L["n_pad"]].set(b_out)
    return slab


# --------------------------- pure-JAX reference --------------------------------
def moe_forward_ref(state, skill, raw):
    w1, b1, w2, b2, wg, bg, w_heads, b_heads = raw
    x = jnp.concatenate([state, skill], axis=1)
    h1 = jax.nn.silu(x @ w1 + b1)
    h2 = jax.nn.silu(h1 @ w2 + b2)
    logits = h2 @ wg + bg
    means = jnp.stack([h2 @ w_heads[e] + b_heads[e]
                       for e in range(len(w_heads))], axis=1)
    return logits, means


# ----------------------------------- main --------------------------------------
if __name__ == "__main__":
    # small config consistent with the module
    batch = 8
    state_dim = 8
    skill_dim = 4
    num_coordinates = 0           # prep_input_fn is identity
    hidden_dim = 32
    num_experts = 4

    key = jax.random.PRNGKey(0)
    k_state, k_skill, k_params = jax.random.split(key, 3)

    state = jax.random.normal(k_state, (batch, state_dim), jnp.float32)
    skill = jax.random.normal(k_skill, (batch, skill_dim), jnp.float32)
    raw = init_raw_params(k_params, state_dim, skill_dim, hidden_dim, num_experts)
    slab = pack_params(raw, state_dim, skill_dim, hidden_dim, num_experts)

    logits, means = moe_forward(state, skill, slab,
                                hidden_dim=hidden_dim,
                                num_experts=num_experts,
                                state_dim=state_dim)
    jax.block_until_ready((logits, means))

    # correctness check vs pure-JAX reference (torch-layout weights)
    ref_logits, ref_means = moe_forward_ref(state, skill, raw)
    assert logits.shape == (batch, num_experts)
    assert means.shape == (batch, num_experts, state_dim)
    assert jnp.allclose(logits, ref_logits, atol=1e-5, rtol=1e-5)
    assert jnp.allclose(means, ref_means, atol=1e-5, rtol=1e-5)

    # TODO(synk): the MixtureSameFamily distribution object itself (sampling /
    # log_prob / intrinsic_rew glue) is host-side logic over (logits, means)
    # with identity covariance and is not part of the Pallas hot path.
    print("KERNEL_OK")
</pallas_src>

<mosaic_0001>
module attributes {stable_mosaic.version = 11 : i64} {
  func.func @_moe_kernel(%arg0: i32, %arg1: memref<8x16xf32, #tpu.memory_space<vmem>>, %arg2: memref<104x128xf32, #tpu.memory_space<vmem>>, %arg3: memref<8x128xf32, #tpu.memory_space<vmem>>) attributes {dimension_semantics = [#tpu.dimension_semantics<parallel>], iteration_bounds = array<i64: 1>, scalar_prefetch = 0 : i64, scratch_operands = 0 : i64, tpu.core_type = #tpu.core_type<tc>, window_params = [{transform_indices = @transform_0, window_bounds = array<i64: 8, 16>}, {pipeline_mode = #tpu.pipeline_mode<synchronous>, transform_indices = @transform_1, window_bounds = array<i64: 104, 128>}, {transform_indices = @transform_2, window_bounds = array<i64: 8, 128>}]} {
    %c0 = arith.constant 0 : index
    %c0_0 = arith.constant 0 : index
    %0 = vector.load %arg1[%c0, %c0_0] : memref<8x16xf32, #tpu.memory_space<vmem>>, vector<8x16xf32>
    %c0_1 = arith.constant 0 : index
    %c0_2 = arith.constant 0 : index
    %1 = vector.load %arg2[%c0_1, %c0_2] : memref<104x128xf32, #tpu.memory_space<vmem>>, vector<16x32xf32>
    %c16 = arith.constant 16 : index
    %c0_3 = arith.constant 0 : index
    %2 = vector.load %arg2[%c16, %c0_3] : memref<104x128xf32, #tpu.memory_space<vmem>>, vector<1x32xf32>
    %cst = arith.constant dense<0.000000e+00> : vector<8x32xf32>
    %3 = tpu.matmul %0, %1, %cst {dimension_numbers = #tpu.dot_dimension_numbers<[1], [0], [0], [1], [0, 0, 1, 1], [], []>} : vector<8x16xf32>, vector<16x32xf32>, vector<8x32xf32> -> vector<8x32xf32>
    %4 = vector.broadcast %2 : vector<1x32xf32> to vector<8x32xf32>
    %5 = arith.addf %3, %4 : vector<8x32xf32>
    %6 = arith.negf %5 : vector<8x32xf32>
    %7 = math.exp %6 : vector<8x32xf32>
    %cst_4 = arith.constant 1.000000e+00 : f32
    %8 = vector.broadcast %cst_4 : f32 to vector<8x32xf32>
    %9 = arith.addf %8, %7 : vector<8x32xf32>
    %10 = arith.divf %8, %9 : vector<8x32xf32>
    %11 = arith.mulf %5, %10 : vector<8x32xf32>
    %c24 = arith.constant 24 : index
    %c0_5 = arith.constant 0 : index
    %12 = vector.load %arg2[%c24, %c0_5] : memref<104x128xf32, #tpu.memory_space<vmem>>, vector<32x32xf32>
    %c56 = arith.constant 56 : index
    %c0_6 = arith.constant 0 : index
    %13 = vector.load %arg2[%c56, %c0_6] : memref<104x128xf32, #tpu.memory_space<vmem>>, vector<1x32xf32>
    %cst_7 = arith.constant dense<0.000000e+00> : vector<8x32xf32>
    %14 = tpu.matmul %11, %12, %cst_7 {dimension_numbers = #tpu.dot_dimension_numbers<[1], [0], [0], [1], [0, 0, 1, 1], [], []>} : vector<8x32xf32>, vector<32x32xf32>, vector<8x32xf32> -> vector<8x32xf32>
    %15 = vector.broadcast %13 : vector<1x32xf32> to vector<8x32xf32>
    %16 = arith.addf %14, %15 : vector<8x32xf32>
    %17 = arith.negf %16 : vector<8x32xf32>
    %18 = math.exp %17 : vector<8x32xf32>
    %cst_8 = arith.constant 1.000000e+00 : f32
    %19 = vector.broadcast %cst_8 : f32 to vector<8x32xf32>
    %20 = arith.addf %19, %18 : vector<8x32xf32>
    %21 = arith.divf %19, %20 : vector<8x32xf32>
    %22 = arith.mulf %16, %21 : vector<8x32xf32>
    %c64 = arith.constant 64 : index
    %c0_9 = arith.constant 0 : index
    %23 = vector.load %arg2[%c64, %c0_9] : memref<104x128xf32, #tpu.memory_space<vmem>>, vector<32x128xf32>
    %c96 = arith.constant 96 : index
    %c0_10 = arith.constant 0 : index
    %24 = vector.load %arg2[%c96, %c0_10] : memref<104x128xf32, #tpu.memory_space<vmem>>, vector<1x128xf32>
    %cst_11 = arith.constant dense<0.000000e+00> : vector<8x128xf32>
    %25 = tpu.matmul %22, %23, %cst_11 {dimension_numbers = #tpu.dot_dimension_numbers<[1], [0], [0], [1], [0, 0, 1, 1], [], []>} : vector<8x32xf32>, vector<32x128xf32>, vector<8x128xf32> -> vector<8x128xf32>
    %26 = vector.broadcast %24 : vector<1x128xf32> to vector<8x128xf32>
    %27 = arith.addf %25, %26 : vector<8x128xf32>
    %c0_12 = arith.constant 0 : index
    %c0_13 = arith.constant 0 : index
    %28 = vector.load %arg3[%c0_12, %c0_13] : memref<8x128xf32, #tpu.memory_space<vmem>>, vector<8x128xf32>
    tpu.vector_store %arg3[%c0_12, %c0_13], %27 {strides = array<i32>} : memref<8x128xf32, #tpu.memory_space<vmem>>, vector<8x128xf32>,
    return
  }
  func.func @transform_0(%arg0: i32) -> (i32, i32) {
    %c0_i32 = arith.constant 0 : i32
    %c0_i32_0 = arith.constant 0 : i32
    return %arg0, %c0_i32 : i32, i32
  }
  func.func @transform_1(%arg0: i32) -> (i32, i32) {
    %c0_i32 = arith.constant 0 : i32
    %c0_i32_0 = arith.constant 0 : i32
    %c0_i32_1 = arith.constant 0 : i32
    return %c0_i32, %c0_i32_0 : i32, i32
  }
  func.func @transform_2(%arg0: i32) -> (i32, i32) {
    %c0_i32 = arith.constant 0 : i32
    %c0_i32_0 = arith.constant 0 : i32
    return %arg0, %c0_i32 : i32, i32
  }
}

</mosaic_0001>

<llo_original>
// kernel: moe_forward.1
$region0: #{moe_forward.1}
  #allocation0 [shape = 'u32[]', space=smem, size = 0x4, offset = 0x4, fixed_abs, tag = 'smem constant byte address 0x4 - core index']
  #allocation1 [shape = 'u32[144,128]{1,0:T(1,128)}', space=vmem, size = 0x12000, scoped, tag = 'internal scratch']
  %s0 = inlined_call_operand.vmem [shape: f32[8,16], index: 0, kind: input, shape index: {}]
  %s1 = inlined_call_operand.hbm [shape: f32[104,128], index: 1, kind: input, shape index: {}]
  %s2 = inlined_call_operand.vmem [shape: f32[8,128], index: 2, kind: output, shape index: {}]
  %s3 = sld [smem:[#allocation0]]
  $region22: #{moe_forward.1} parent=0
    _
  %s5 = ssub.s32 1, %s3
  %s6 = scalar_select 0, %s5, %s3
  $region1: #{moe_forward.1} parent=0
    #allocation2 [shape = 'u8[53248]{0}', space=vmem, size = 0xd000, scoped, tag = 'input window, operand 1, single buffered']
    #allocation3 [shape = 's32[1]{0}', space=sflag, size = 0x4, scoped, tag = 'scoped memory for moe_forward.1']
    %7 = vsyncpa [#allocation3], 0
    // Predicated region
    $region2: #{moe_forward.1} parent=1 // pred_check
      _
    $region3: #{moe_forward.1} parent=1 // pred_check_branch
      %9 = sbr.rel (0) target = $region5
    $region4: #{moe_forward.1} parent=1 // pred_region
      _
    $region5: #{moe_forward.1} parent=1 // pred_fallthru
      _
    // Predicated region
    $region6: #{moe_forward.1} parent=1 // pred_check
      _
    $region7: #{moe_forward.1} parent=1 // pred_check_branch
      %11 = sbr.rel (0) target = $region9
    $region8: #{moe_forward.1} parent=1 // pred_region
      %s13 = ssub.s32 1664, 1664
      %14 = vsyncadd [#allocation3], %s13
      %s15 = sshll.u32 [#allocation2], 4
      %s16 = int_to_ptr.vmem [resolvable:$true] %s15
      %21 = dma.hbm_to_vmem [thread:$0]  %s1, 1664, %s16, [#allocation3], 128, 128, 8
    $region9: #{moe_forward.1} parent=1 // pred_fallthru
      _
    // Predicated region
    $region10: #{moe_forward.1} parent=1 // pred_check
      _
    $region11: #{moe_forward.1} parent=1 // pred_check_branch
      %23 = sbr.rel (0) target = $region13
    $region12: #{moe_forward.1} parent=1 // pred_region
      %24 = dma.done [#allocation3], 1664
    $region13: #{moe_forward.1} parent=1 // pred_fallthru
      _
    %v25 = vld [vmem:[%s0] sm:$0xff]
    %v26 = vld [vmem:[#allocation2] sm:$0xff]
    %v27 = vld [vmem:[#allocation2 + $0x8] sm:$0xff]
    %v28 = vld [vmem:[#allocation2 + $0x10] sm:$0x1]
    %v29 = vlaneseq
    %v30 = vshrl.u32 %v29, 7
    %v31 = vsub.s32 0, %v30
    %v32 = vrot.slane %v28, %v31
    %vm33 = vcmask 130048
    %v35 = vsel %vm33, %v25, 0
    %37 = vmatprep.subr.mxu0 0.0
    %38 = vmatpush1.msra.mxu0 %v26
    %39 = vmatprep.subr.mxu0 0.0
    %40 = vmatpush1.msra.mxu0 %v27
    %41 = vmatprep.subr.mxu0 0.0
    %42 = vmatpush1.msra.mxu0 0.0
    %43 = vmatprep.subr.mxu0 0.0
    %44 = vmatpush1.msra.mxu0 0.0
    %45 = vmatprep.subr.mxu0 0.0
    %46 = vmatpush1.msra.mxu0 0.0
    %47 = vmatprep.subr.mxu0 0.0
    %48 = vmatpush1.msra.mxu0 0.0
    %49 = vmatprep.subr.mxu0 0.0
    %50 = vmatpush1.msra.mxu0 0.0
    %51 = vmatprep.subr.mxu0 0.0
    %52 = vmatpush1.msra.mxu0 0.0
    %53 = vmatprep.subr.mxu0 0.0
    %54 = vmatpush1.msra.mxu0 0.0
    %55 = vmatprep.subr.mxu0 0.0
    %56 = vmatpush1.msra.mxu0 0.0
    %57 = vmatprep.subr.mxu0 0.0
    %58 = vmatpush1.msra.mxu0 0.0
    %59 = vmatprep.subr.mxu0 0.0
    %60 = vmatpush1.msra.mxu0 0.0
    %61 = vmatprep.subr.mxu0 0.0
    %62 = vmatpush1.msra.mxu0 0.0
    %63 = vmatprep.subr.mxu0 0.0
    %64 = vmatpush1.msra.mxu0 0.0
    %65 = vmatprep.subr.mxu0 0.0
    %66 = vmatpush1.msra.mxu0 0.0
    %67 = vmatprep.subr.mxu0 0.0
    %68 = vmatpush1.msra.mxu0 0.0
    %69 = vmatprep.subr.mxu0 0.0
    %70 = vmatpush1.msra.mxu0 0.0
    %71 = vmatprep.subr.mxu0 0.0
    %72 = vmatpush1.msra.mxu0 0.0
    %73 = vmatprep.subr.mxu0 0.0
    %74 = vmatpush1.msra.mxu0 0.0
    %75 = vmatprep.subr.mxu0 0.0
    %76 = vmatpush1.msra.mxu0 0.0
    %77 = vmatprep.subr.mxu0 0.0
    %78 = vmatpush1.msra.mxu0 0.0
    %79 = vmatprep.subr.mxu0 0.0
    %80 = vmatpush1.msra.mxu0 0.0
    %81 = vmatprep.subr.mxu0 0.0
    %82 = vmatpush1.msra.mxu0 0.0
    %83 = vmatprep.subr.mxu0 0.0
    %84 = vmatpush1.msra.mxu0 0.0
    %85 = vmatprep.subr.mxu0 0.0
    %86 = vmatpush1.msra.mxu0 0.0
    %87 = vmatprep.subr.mxu0 0.0
    %88 = vmatpush1.msra.mxu0 0.0
    %89 = vmatprep.subr.mxu0 0.0
    %90 = vmatpush1.msra.mxu0 0.0
    %91 = vmatprep.subr.mxu0 0.0
    %92 = vmatpush1.msra.mxu0 0.0
    %93 = vmatprep.subr.mxu0 0.0
    %94 = vmatpush1.msra.mxu0 0.0
    %95 = vmatprep.subr.mxu0 0.0
    %96 = vmatpush1.msra.mxu0 0.0
    %97 = vmatprep.subr.mxu0 0.0
    %98 = vmatpush1.msra.mxu0 0.0
    %99 = vmatprep.subr.mxu0 0.0
    %100 = vmatpush1.msra.mxu0 0.0
    %101 = vmatprep.mubr.f32.mxu0 0.0
    %102 = vmatmul.mubr.f32.gmra.mrb[0].mxu0 %v35
    %v103 = vpop.f32.mrb[0].mxu0
    %v104 = vadd.f32 %v32, %v103
    %v105 = vpop.f32.mrb[0].mxu0
    %106 = vdwg.mxu0
    %v107 = vxor.u32 %v104, 2147483648
    %v108 = vmul.f32 %v107, 1.442695
    %v109 = vpow.pop %v108
    %v110 = vadd.f32 %v109, 1.0
    %v111 = vrcp.pop %v110
    %v112 = vmul.f32 1.0, %v111
    %v113 = vmul.f32 %v104, %v112
    %v114 = vld [vmem:[#allocation2 + $0x18] sm:$0xff]
    %v115 = vld [vmem:[#allocation2 + $0x20] sm:$0xff]
    %v116 = vld [vmem:[#allocation2 + $0x28] sm:$0xff]
    %v117 = vld [vmem:[#allocation2 + $0x30] sm:$0xff]
    %v118 = vld [vmem:[#allocation2 + $0x38] sm:$0x1]
    %v119 = vlaneseq
    %v120 = vshrl.u32 %v119, 7
    %v121 = vsub.s32 0, %v120
    %v122 = vrot.slane %v118, %v121
    %vm123 = vcmask 261120
    %v125 = vsel %vm123, %v113, 0
    %127 = vmatprep.subr.mxu0 0.0
    %128 = vmatpush1.msra.mxu0 %v114
    %129 = vmatprep.subr.mxu0 0.0
    %130 = vmatpush1.msra.mxu0 %v115
    %131 = vmatprep.subr.mxu0 0.0
    %132 = vmatpush1.msra.mxu0 %v116
    %133 = vmatprep.subr.mxu0 0.0
    %134 = vmatpush1.msra.mxu0 %v117
    %135 = vmatprep.subr.mxu0 0.0
    %136 = vmatpush1.msra.mxu0 0.0
    %137 = vmatprep.subr.mxu0 0.0
    %138 = vmatpush1.msra.mxu0 0.0
    %139 = vmatprep.subr.mxu0 0.0
    %140 = vmatpush1.msra.mxu0 0.0
    %141 = vmatprep.subr.mxu0 0.0
    %142 = vmatpush1.msra.mxu0 0.0
    %143 = vmatprep.subr.mxu0 0.0
    %144 = vmatpush1.msra.mxu0 0.0
    %145 = vmatprep.subr.mxu0 0.0
    %146 = vmatpush1.msra.mxu0 0.0
    %147 = vmatprep.subr.mxu0 0.0
    %148 = vmatpush1.msra.mxu0 0.0
    %149 = vmatprep.subr.mxu0 0.0
    %150 = vmatpush1.msra.mxu0 0.0
    %151 = vmatprep.subr.mxu0 0.0
    %152 = vmatpush1.msra.mxu0 0.0
    %153 = vmatprep.subr.mxu0 0.0
    %154 = vmatpush1.msra.mxu0 0.0
    %155 = vmatprep.subr.mxu0 0.0
    %156 = vmatpush1.msra.mxu0 0.0
    %157 = vmatprep.subr.mxu0 0.0
    %158 = vmatpush1.msra.mxu0 0.0
    %159 = vmatprep.subr.mxu0 0.0
    %160 = vmatpush1.msra.mxu0 0.0
    %161 = vmatprep.subr.mxu0 0.0
    %162 = vmatpush1.msra.mxu0 0.0
    %163 = vmatprep.subr.mxu0 0.0
    %164 = vmatpush1.msra.mxu0 0.0
    %165 = vmatprep.subr.mxu0 0.0
    %166 = vmatpush1.msra.mxu0 0.0
    %167 = vmatprep.subr.mxu0 0.0
    %168 = vmatpush1.msra.mxu0 0.0
    %169 = vmatprep.subr.mxu0 0.0
    %170 = vmatpush1.msra.mxu0 0.0
    %171 = vmatprep.subr.mxu0 0.0
    %172 = vmatpush1.msra.mxu0 0.0
    %173 = vmatprep.subr.mxu0 0.0
    %174 = vmatpush1.msra.mxu0 0.0
    %175 = vmatprep.subr.mxu0 0.0
    %176 = vmatpush1.msra.mxu0 0.0
    %177 = vmatprep.subr.mxu0 0.0
    %178 = vmatpush1.msra.mxu0 0.0
    %179 = vmatprep.subr.mxu0 0.0
    %180 = vmatpush1.msra.mxu0 0.0
    %181 = vmatprep.subr.mxu0 0.0
    %182 = vmatpush1.msra.mxu0 0.0
    %183 = vmatprep.subr.mxu0 0.0
    %184 = vmatpush1.msra.mxu0 0.0
    %185 = vmatprep.subr.mxu0 0.0
    %186 = vmatpush1.msra.mxu0 0.0
    %187 = vmatprep.subr.mxu0 0.0
    %188 = vmatpush1.msra.mxu0 0.0
    %189 = vmatprep.subr.mxu0 0.0
    %190 = vmatpush1.msra.mxu0 0.0
    %191 = vmatprep.mubr.f32.mxu0 0.0
    %192 = vmatmul.mubr.f32.gmra.mrb[0].mxu0 %v125
    %v193 = vpop.f32.mrb[0].mxu0
    %v194 = vadd.f32 %v122, %v193
    %v195 = vpop.f32.mrb[0].mxu0
    %196 = vdwg.mxu0
    %v197 = vxor.u32 %v194, 2147483648
    %v198 = vmul.f32 %v197, 1.442695
    %v199 = vpow.pop %v198
    %v200 = vadd.f32 %v199, 1.0
    %v201 = vrcp.pop %v200
    %v202 = vmul.f32 1.0, %v201
    %v203 = vmul.f32 %v194, %v202
    %v204 = vld [vmem:[#allocation2 + $0x40] sm:$0xff]
    %v205 = vld [vmem:[#allocation2 + $0x48] sm:$0xff]
    %v206 = vld [vmem:[#allocation2 + $0x50] sm:$0xff]
    %v207 = vld [vmem:[#allocation2 + $0x58] sm:$0xff]
    %v208 = vld [vmem:[#allocation2 + $0x60] sm:$0x1]
    %v209 = vlaneseq
    %v210 = vshrl.u32 %v209, 7
    %v211 = vsub.s32 0, %v210
    %v212 = vrot.slane %v208, %v211
    %v214 = vsel %vm123, %v203, 0
    %216 = vmatprep.subr.mxu0 0.0
    %217 = vmatpush1.msra.mxu0 %v204
    %218 = vmatprep.subr.mxu0 0.0
    %219 = vmatpush1.msra.mxu0 %v205
    %220 = vmatprep.subr.mxu0 0.0
    %221 = vmatpush1.msra.mxu0 %v206
    %222 = vmatprep.subr.mxu0 0.0
    %223 = vmatpush1.msra.mxu0 %v207
    %224 = vmatprep.subr.mxu0 0.0
    %225 = vmatpush1.msra.mxu0 0.0
    %226 = vmatprep.subr.mxu0 0.0
    %227 = vmatpush1.msra.mxu0 0.0
    %228 = vmatprep.subr.mxu0 0.0
    %229 = vmatpush1.msra.mxu0 0.0
    %230 = vmatprep.subr.mxu0 0.0
    %231 = vmatpush1.msra.mxu0 0.0
    %232 = vmatprep.subr.mxu0 0.0
    %233 = vmatpush1.msra.mxu0 0.0
    %234 = vmatprep.subr.mxu0 0.0
    %235 = vmatpush1.msra.mxu0 0.0
    %236 = vmatprep.subr.mxu0 0.0
    %237 = vmatpush1.msra.mxu0 0.0
    %238 = vmatprep.subr.mxu0 0.0
    %239 = vmatpush1.msra.mxu0 0.0
    %240 = vmatprep.subr.mxu0 0.0
    %241 = vmatpush1.msra.mxu0 0.0
    %242 = vmatprep.subr.mxu0 0.0
    %243 = vmatpush1.msra.mxu0 0.0
    %244 = vmatprep.subr.mxu0 0.0
    %245 = vmatpush1.msra.mxu0 0.0
    %246 = vmatprep.subr.mxu0 0.0
    %247 = vmatpush1.msra.mxu0 0.0
    %248 = vmatprep.subr.mxu0 0.0
    %249 = vmatpush1.msra.mxu0 0.0
    %250 = vmatprep.subr.mxu0 0.0
    %251 = vmatpush1.msra.mxu0 0.0
    %252 = vmatprep.subr.mxu0 0.0
    %253 = vmatpush1.msra.mxu0 0.0
    %254 = vmatprep.subr.mxu0 0.0
    %255 = vmatpush1.msra.mxu0 0.0
    %256 = vmatprep.subr.mxu0 0.0
    %257 = vmatpush1.msra.mxu0 0.0
    %258 = vmatprep.subr.mxu0 0.0
    %259 = vmatpush1.msra.mxu0 0.0
    %260 = vmatprep.subr.mxu0 0.0
    %261 = vmatpush1.msra.mxu0 0.0
    %262 = vmatprep.subr.mxu0 0.0
    %263 = vmatpush1.msra.mxu0 0.0
    %264 = vmatprep.subr.mxu0 0.0
    %265 = vmatpush1.msra.mxu0 0.0
    %266 = vmatprep.subr.mxu0 0.0
    %267 = vmatpush1.msra.mxu0 0.0
    %268 = vmatprep.subr.mxu0 0.0
    %269 = vmatpush1.msra.mxu0 0.0
    %270 = vmatprep.subr.mxu0 0.0
    %271 = vmatpush1.msra.mxu0 0.0
    %272 = vmatprep.subr.mxu0 0.0
    %273 = vmatpush1.msra.mxu0 0.0
    %274 = vmatprep.subr.mxu0 0.0
    %275 = vmatpush1.msra.mxu0 0.0
    %276 = vmatprep.subr.mxu0 0.0
    %277 = vmatpush1.msra.mxu0 0.0
    %278 = vmatprep.subr.mxu0 0.0
    %279 = vmatpush1.msra.mxu0 0.0
    %280 = vmatprep.mubr.f32.mxu0 0.0
    %281 = vmatmul.mubr.f32.gmra.mrb[0].mxu0 %v214
    %v282 = vpop.f32.mrb[0].mxu0
    %v283 = vadd.f32 %v212, %v282
    %v284 = vpop.f32.mrb[0].mxu0
    %285 = vdwg.mxu0
    %286 = vst [vmem:[%s2] sm:$0xff] %v283
    // Predicated region
    $region14: #{moe_forward.1} parent=1 // pred_check
      _
    $region15: #{moe_forward.1} parent=1 // pred_check_branch
      %288 = sbr.rel (0) target = $region17
    $region16: #{moe_forward.1} parent=1 // pred_region
      _
    $region17: #{moe_forward.1} parent=1 // pred_fallthru
      _
    // Predicated region
    $region18: #{moe_forward.1} parent=1 // pred_check
      _
    $region19: #{moe_forward.1} parent=1 // pred_check_branch
      %290 = sbr.rel (0) target = $region21
    $region20: #{moe_forward.1} parent=1 // pred_region
      _
    $region21: #{moe_forward.1} parent=1 // pred_fallthru
      _
    %291 = vsyncpa [#allocation3], 1

</llo_original>
